<compile_context>
chip_gen: v7x
topology: tpu7x:2x2x1
jax: 0.10.0
libtpu: 0.0.40
codegen_flags: <defaults>
</compile_context>

<pallas_src>
import functools

import jax
import jax.numpy as jnp
from jax.experimental import pallas as pl
from jax.experimental.pallas import tpu as pltpu


_LANE = 128


# --------------------------------------------------------------------------
# VMEM budgets (generation-aware).
# --------------------------------------------------------------------------
def _vmem_limit_bytes():
    """Scoped-VMEM limit from the actual chip (7/8 of physical, headroom for
    compiler-internal scratch).  Falls back to the smallest per-TC VMEM (v7x,
    64 MiB) if the query is unavailable."""
    cap = 64 * 1024 * 1024
    try:
        info = pltpu.get_tpu_info()
        cap_attr = int(getattr(info, "vmem_capacity_bytes", 0) or 0)
        if cap_attr > 0:
            cap = cap_attr
    except Exception:  # pragma: no cover - non-TPU backends / older jax
        pass
    return (cap * 7) // 8


def _budget_elems(vmem_limit, itemsize):
    """Max elements per x block: 2 double-buffered input buffers + 2 output
    buffers in the native dtype, plus one f32-sized in-kernel temporary
    (the upcast operand of the f32 pooling reduce)."""
    return vmem_limit // (4 * itemsize + 4)


def _pick_batch_block(n, c, hw, budget_elems):
    """Divisor bn of n whose (bn, C, HW) block fits the budget.  Prefers
    bn <= n//2 so the grid has >=2 'parallel' steps (both v7x TensorCores)."""
    divisors = [bn for bn in range(n, 0, -1) if n % bn == 0]
    if n >= 2:
        for bn in divisors:
            if bn <= n // 2 and bn * c * hw <= budget_elems:
                return bn
    for bn in divisors:
        if bn * c * hw <= budget_elems:
            return bn
    return None  # even a single image does not fit -> two-pass path


def _pick_hw_tile(bn, c, hw_pad, budget_elems):
    """Largest multiple-of-128 divisor of hw_pad fitting the budget."""
    best = _LANE
    thw = _LANE
    while thw <= hw_pad:
        if hw_pad % thw == 0 and bn * c * thw <= budget_elems:
            best = thw
        thw += _LANE
    return best


# --------------------------------------------------------------------------
# Single-pass kernel: whole (bn, C, HW) image block resident in VMEM.
# --------------------------------------------------------------------------
def _ca_single_pass_kernel(x_ref, w1t_ref, w2t_ref, o_ref):
    hw = x_ref.shape[-1]
    # Pool over HW.  Only the sum operand is upcast to f32; max commutes with
    # a monotone cast, so it runs in the native dtype and casts the (bn,C) row.
    ssum = jnp.sum(x_ref[...].astype(jnp.float32), axis=-1)          # (bn, C)
    smax = jnp.max(x_ref[...], axis=-1).astype(jnp.float32)          # (bn, C)
    # fc1 is linear with no bias: fc1(avg) + fc1(mx) == fc1(avg + mx).
    pooled = ssum * (1.0 / hw) + smax                                 # (bn, C)
    h = jnp.maximum(
        jnp.dot(pooled, w1t_ref[...], preferred_element_type=jnp.float32), 0.0)
    gate = jax.nn.sigmoid(
        jnp.dot(h, w2t_ref[...], preferred_element_type=jnp.float32))
    gate = gate.astype(o_ref.dtype)
    # Gated multiply in the native dtype (no full f32 copy of the block).
    o_ref[...] = (x_ref[...] * gate[:, :, None]).astype(o_ref.dtype)


# --------------------------------------------------------------------------
# Two-pass fallback (one (C, HW) image exceeds the block budget).
# --------------------------------------------------------------------------
def _ca_pool_fc_kernel(x_ref, w1t_ref, w2t_ref, gate_ref, sum_sc, max_sc,
                       *, hw_total, thw, needs_mask):
    """Pass 1: accumulate sum/max over HW tiles (batch-parallel outer axis),
    then fused FC -> per-image gate."""
    s = pl.program_id(1)

    @pl.when(s == 0)
    def _():
        sum_sc[...] = jnp.zeros_like(sum_sc)
        max_sc[...] = jnp.full_like(max_sc, -jnp.inf)

    if needs_mask:
        # HW was padded to a multiple of 128 in the wrapper; mask the pad.
        pos = s * thw + jax.lax.broadcasted_iota(jnp.int32, x_ref.shape, 2)
        valid = pos < hw_total
        xf = x_ref[...].astype(jnp.float32)
        sum_sc[...] += jnp.sum(jnp.where(valid, xf, 0.0), axis=-1)
        max_sc[...] = jnp.maximum(
            max_sc[...], jnp.max(jnp.where(valid, xf, -jnp.inf), axis=-1))
    else:
        sum_sc[...] += jnp.sum(x_ref[...].astype(jnp.float32), axis=-1)
        max_sc[...] = jnp.maximum(
            max_sc[...], jnp.max(x_ref[...], axis=-1).astype(jnp.float32))

    @pl.when(s == pl.num_programs(1) - 1)
    def _():
        pooled = sum_sc[...] * (1.0 / hw_total) + max_sc[...]
        h = jnp.maximum(
            jnp.dot(pooled, w1t_ref[...], preferred_element_type=jnp.float32), 0.0)
        g = jax.nn.sigmoid(
            jnp.dot(h, w2t_ref[...], preferred_element_type=jnp.float32))
        # Emit the gate already in x.dtype so pass 2 does no per-step casts.
        gate_ref[...] = g[:, :, None].astype(gate_ref.dtype)


def _ca_gate_mul_kernel(x_ref, gate_ref, o_ref):
    """Pass 2: streaming, HBM-roofline gated multiply in the native dtype."""
    o_ref[...] = (x_ref[...] * gate_ref[...]).astype(o_ref.dtype)


# --------------------------------------------------------------------------
# Public wrapper.
# --------------------------------------------------------------------------
def channel_attention(x, w1, w2, *, force_two_pass=False, hw_tile=None):
    """x: (N, C, H, W); w1: (C_red, C) fc1 weight; w2: (C, C_red) fc2 weight."""
    N, C, H, W = x.shape
    C_red = w1.shape[0]
    HW = H * W
    itemsize = jnp.dtype(x.dtype).itemsize

    vmem_limit = _vmem_limit_bytes()
    budget_elems = _budget_elems(vmem_limit, itemsize)

    x_flat = x.reshape(N, C, HW)
    # Pre-transpose the 1x1-conv weights once so both matmuls run as
    # lane-dense row-layout GEMMs: (bn,C)@(C,C_red) and (bn,C_red)@(C_red,C).
    w1t = jnp.asarray(w1, jnp.float32).T                     # (C, C_red)
    w2t = jnp.asarray(w2, jnp.float32).T                     # (C_red, C)

    bn = None if force_two_pass else _pick_batch_block(N, C, HW, budget_elems)

    if bn is not None:
        # ----- single fused pass: x is read once, written once -----
        out_flat = pl.pallas_call(
            _ca_single_pass_kernel,
            out_shape=jax.ShapeDtypeStruct((N, C, HW), x.dtype),
            grid_spec=pltpu.PrefetchScalarGridSpec(
                num_scalar_prefetch=0,
                grid=(N // bn,),
                in_specs=[
                    pl.BlockSpec((bn, C, HW), lambda n: (n, 0, 0)),
                    # Constant index maps: weights are DMA'd once, stay resident.
                    pl.BlockSpec((C, C_red), lambda n: (0, 0)),
                    pl.BlockSpec((C_red, C), lambda n: (0, 0)),
                ],
                out_specs=pl.BlockSpec((bn, C, HW), lambda n: (n, 0, 0)),
            ),
            compiler_params=pltpu.CompilerParams(
                dimension_semantics=("parallel",),
                vmem_limit_bytes=vmem_limit),
            cost_estimate=pl.CostEstimate(
                flops=int(3 * N * C * HW + 4 * N * C * C_red),
                transcendentals=int(N * C),
                bytes_accessed=int(2 * N * C * HW * itemsize)),
        )(x_flat, w1t, w2t)
        return out_flat.reshape(N, C, H, W)

    # ----- two-pass fallback: (C, HW) image too large for one VMEM block -----
    # Lane-dense tiles only: pad HW up to a multiple of 128 and mask the pad.
    HW_pad = ((HW + _LANE - 1) // _LANE) * _LANE
    needs_mask = HW_pad != HW
    x_proc = x_flat if not needs_mask else jnp.pad(
        x_flat, ((0, 0), (0, 0), (0, HW_pad - HW)))

    bn2 = 1  # one image per block -> max batch parallelism, tiny scratch/gate
    if hw_tile is not None:
        assert hw_tile % _LANE == 0 and HW_pad % hw_tile == 0, \
            "hw_tile must be a multiple of 128 dividing padded HW"
        thw = hw_tile
    else:
        thw = _pick_hw_tile(bn2, C, HW_pad, budget_elems)
    n_hw = HW_pad // thw

    # Pass 1: pool + FC.  Batch axis "parallel" (megacore), HW reduction axis
    # last / "arbitrary"; per-image gate block stays resident, written once.
    gate = pl.pallas_call(
        functools.partial(_ca_pool_fc_kernel,
                          hw_total=HW, thw=thw, needs_mask=needs_mask),
        out_shape=jax.ShapeDtypeStruct((N, C, 1), x.dtype),
        grid_spec=pltpu.PrefetchScalarGridSpec(
            num_scalar_prefetch=0,
            grid=(N // bn2, n_hw),
            in_specs=[
                pl.BlockSpec((bn2, C, thw), lambda b, s: (b, 0, s)),
                pl.BlockSpec((C, C_red), lambda b, s: (0, 0)),
                pl.BlockSpec((C_red, C), lambda b, s: (0, 0)),
            ],
            out_specs=pl.BlockSpec((bn2, C, 1), lambda b, s: (b, 0, 0)),
            scratch_shapes=[
                pltpu.VMEM((bn2, C), jnp.float32),   # running sum
                pltpu.VMEM((bn2, C), jnp.float32),   # running max
            ],
        ),
        compiler_params=pltpu.CompilerParams(
            dimension_semantics=("parallel", "arbitrary"),
            vmem_limit_bytes=vmem_limit),
        cost_estimate=pl.CostEstimate(
            flops=int(2 * N * C * HW_pad + 4 * N * C * C_red),
            transcendentals=int(N * C),
            bytes_accessed=int(N * C * HW_pad * itemsize + N * C * itemsize)),
    )(x_proc, w1t, w2t)

    # Pass 2: streaming gated multiply, parallel over batch and HW tiles.
    out_pad = pl.pallas_call(
        _ca_gate_mul_kernel,
        out_shape=jax.ShapeDtypeStruct((N, C, HW_pad), x.dtype),
        grid_spec=pltpu.PrefetchScalarGridSpec(
            num_scalar_prefetch=0,
            grid=(N // bn2, n_hw),
            in_specs=[
                pl.BlockSpec((bn2, C, thw), lambda b, s: (b, 0, s)),
                pl.BlockSpec((bn2, C, 1), lambda b, s: (b, 0, 0)),
            ],
            out_specs=pl.BlockSpec((bn2, C, thw), lambda b, s: (b, 0, s)),
        ),
        compiler_params=pltpu.CompilerParams(
            dimension_semantics=("parallel", "parallel"),
            vmem_limit_bytes=vmem_limit),
        cost_estimate=pl.CostEstimate(
            flops=int(N * C * HW_pad),
            transcendentals=0,
            bytes_accessed=int(2 * N * C * HW_pad * itemsize + N * C * itemsize)),
    )(x_proc, gate)

    out_flat = out_pad[:, :, :HW] if needs_mask else out_pad
    return out_flat.reshape(N, C, H, W)


# --------------------------------------------------------------------------
# Pure-JAX reference matching the PyTorch forward exactly.
# --------------------------------------------------------------------------
def channel_attention_ref(x, w1, w2):
    avg = jnp.mean(x, axis=(2, 3), keepdims=True)            # (N, C, 1, 1)
    mx = jnp.max(x, axis=(2, 3), keepdims=True)              # (N, C, 1, 1)
    avg_o = jnp.einsum("rc,nchw->nrhw", w1, avg)
    max_o = jnp.einsum("rc,nchw->nrhw", w1, mx)
    h = jax.nn.relu(avg_o + max_o)
    out = jnp.einsum("cr,nrhw->nchw", w2, h)
    return x * jax.nn.sigmoid(out)


if __name__ == "__main__":
    # Shapes consistent with the module: in_channels=64, reduction=16.
    key = jax.random.PRNGKey(0)
    kx, k1, k2, kx2 = jax.random.split(key, 4)

    N, C, reduction = 2, 64, 16
    C_red = C // reduction
    w1 = jax.random.normal(k1, (C_red, C), dtype=jnp.float32) * 0.1   # fc1 weight
    w2 = jax.random.normal(k2, (C, C_red), dtype=jnp.float32) * 0.1   # fc2 weight

    # Test 1: single fused pass; N=2 -> grid=(2,) so both v7x cores get a block.
    x = jax.random.normal(kx, (N, C, 16, 16), dtype=jnp.float32)
    y = jax.block_until_ready(channel_attention(x, w1, w2))
    y_ref = channel_attention_ref(x, w1, w2)
    assert jnp.allclose(y, y_ref, atol=1e-5, rtol=1e-5), (
        float(jnp.max(jnp.abs(y - y_ref))))

    # Test 2: two-pass fallback with a non-128-multiple HW (15*15=225): padded
    # to 256, masked pooling, lane-aligned 128-wide tiles, real 2-step reduction.
    x2 = jax.random.normal(kx2, (N, C, 15, 15), dtype=jnp.float32)
    y2 = jax.block_until_ready(
        channel_attention(x2, w1, w2, force_two_pass=True, hw_tile=128))
    y2_ref = channel_attention_ref(x2, w1, w2)
    assert jnp.allclose(y2, y2_ref, atol=1e-5, rtol=1e-5), (
        float(jnp.max(jnp.abs(y2 - y2_ref))))

    print("KERNEL_OK")
</pallas_src>

<mosaic_0001>
module attributes {stable_mosaic.version = 11 : i64} {
  func.func @_ca_single_pass_kernel(%arg0: i32, %arg1: memref<1x64x256xf32, #tpu.memory_space<vmem>>, %arg2: memref<64x4xf32, #tpu.memory_space<vmem>>, %arg3: memref<4x64xf32, #tpu.memory_space<vmem>>, %arg4: memref<1x64x256xf32, #tpu.memory_space<vmem>>) attributes {dimension_semantics = [#tpu.dimension_semantics<parallel>], iteration_bounds = array<i64: 2>, scalar_prefetch = 0 : i64, scratch_operands = 0 : i64, tpu.core_type = #tpu.core_type<tc>, window_params = [{transform_indices = @transform_0, window_bounds = array<i64: 1, 64, 256>}, {pipeline_mode = #tpu.pipeline_mode<synchronous>, transform_indices = @transform_1, window_bounds = array<i64: 64, 4>}, {pipeline_mode = #tpu.pipeline_mode<synchronous>, transform_indices = @transform_2, window_bounds = array<i64: 4, 64>}, {transform_indices = @transform_3, window_bounds = array<i64: 1, 64, 256>}]} {
    %c0 = arith.constant 0 : index
    %c0_0 = arith.constant 0 : index
    %c0_1 = arith.constant 0 : index
    %0 = vector.load %arg1[%c0, %c0_0, %c0_1] : memref<1x64x256xf32, #tpu.memory_space<vmem>>, vector<1x64x256xf32>
    %cst = arith.constant dense<0.000000e+00> : vector<1x64xf32>
    %1 = vector.multi_reduction <add>, %0, %cst [2] : vector<1x64x256xf32> to vector<1x64xf32>
    %c0_2 = arith.constant 0 : index
    %c0_3 = arith.constant 0 : index
    %c0_4 = arith.constant 0 : index
    %2 = vector.load %arg1[%c0_2, %c0_3, %c0_4] : memref<1x64x256xf32, #tpu.memory_space<vmem>>, vector<1x64x256xf32>
    %cst_5 = arith.constant dense<0xFF800000> : vector<1x64xf32>
    %3 = vector.multi_reduction <maximumf>, %2, %cst_5 [2] : vector<1x64x256xf32> to vector<1x64xf32>
    %cst_6 = arith.constant 3.906250e-03 : f32
    %4 = vector.broadcast %cst_6 : f32 to vector<1x64xf32>
    %5 = arith.mulf %1, %4 : vector<1x64xf32>
    %6 = arith.addf %5, %3 : vector<1x64xf32>
    %c0_7 = arith.constant 0 : index
    %c0_8 = arith.constant 0 : index
    %7 = vector.load %arg2[%c0_7, %c0_8] : memref<64x4xf32, #tpu.memory_space<vmem>>, vector<64x4xf32>
    %cst_9 = arith.constant dense<0.000000e+00> : vector<1x4xf32>
    %8 = tpu.matmul %6, %7, %cst_9 {dimension_numbers = #tpu.dot_dimension_numbers<[1], [0], [0], [1], [0, 0, 1, 1], [], []>} : vector<1x64xf32>, vector<64x4xf32>, vector<1x4xf32> -> vector<1x4xf32>
    %cst_10 = arith.constant 0.000000e+00 : f32
    %9 = vector.broadcast %cst_10 : f32 to vector<1x4xf32>
    %10 = arith.maximumf %8, %9 : vector<1x4xf32>
    %c0_11 = arith.constant 0 : index
    %c0_12 = arith.constant 0 : index
    %11 = vector.load %arg3[%c0_11, %c0_12] : memref<4x64xf32, #tpu.memory_space<vmem>>, vector<4x64xf32>
    %cst_13 = arith.constant dense<0.000000e+00> : vector<1x64xf32>
    %12 = tpu.matmul %10, %11, %cst_13 {dimension_numbers = #tpu.dot_dimension_numbers<[1], [0], [0], [1], [0, 0, 1, 1], [], []>} : vector<1x4xf32>, vector<4x64xf32>, vector<1x64xf32> -> vector<1x64xf32>
    %13 = arith.negf %12 : vector<1x64xf32>
    %14 = math.exp %13 : vector<1x64xf32>
    %cst_14 = arith.constant 1.000000e+00 : f32
    %15 = vector.broadcast %cst_14 : f32 to vector<1x64xf32>
    %16 = arith.addf %15, %14 : vector<1x64xf32>
    %17 = arith.divf %15, %16 : vector<1x64xf32>
    %c0_15 = arith.constant 0 : index
    %c0_16 = arith.constant 0 : index
    %c0_17 = arith.constant 0 : index
    %18 = vector.load %arg1[%c0_15, %c0_16, %c0_17] : memref<1x64x256xf32, #tpu.memory_space<vmem>>, vector<1x64x256xf32>
    %19 = vector.shape_cast %17 : vector<1x64xf32> to vector<1x64x1xf32>
    %20 = vector.broadcast %19 : vector<1x64x1xf32> to vector<1x64x256xf32>
    %21 = arith.mulf %18, %20 : vector<1x64x256xf32>
    %c0_18 = arith.constant 0 : index
    %c0_19 = arith.constant 0 : index
    %c0_20 = arith.constant 0 : index
    %22 = vector.load %arg4[%c0_18, %c0_19, %c0_20] : memref<1x64x256xf32, #tpu.memory_space<vmem>>, vector<1x64x256xf32>
    tpu.vector_store %arg4[%c0_18, %c0_19, %c0_20], %21 {strides = array<i32>} : memref<1x64x256xf32, #tpu.memory_space<vmem>>, vector<1x64x256xf32>,
    return
  }
  func.func @transform_0(%arg0: i32) -> (i32, i32, i32) {
    %c0_i32 = arith.constant 0 : i32
    %c0_i32_0 = arith.constant 0 : i32
    %c0_i32_1 = arith.constant 0 : i32
    return %arg0, %c0_i32, %c0_i32_0 : i32, i32, i32
  }
  func.func @transform_1(%arg0: i32) -> (i32, i32) {
    %c0_i32 = arith.constant 0 : i32
    %c0_i32_0 = arith.constant 0 : i32
    %c0_i32_1 = arith.constant 0 : i32
    return %c0_i32, %c0_i32_0 : i32, i32
  }
  func.func @transform_2(%arg0: i32) -> (i32, i32) {
    %c0_i32 = arith.constant 0 : i32
    %c0_i32_0 = arith.constant 0 : i32
    %c0_i32_1 = arith.constant 0 : i32
    return %c0_i32, %c0_i32_0 : i32, i32
  }
  func.func @transform_3(%arg0: i32) -> (i32, i32, i32) {
    %c0_i32 = arith.constant 0 : i32
    %c0_i32_0 = arith.constant 0 : i32
    %c0_i32_1 = arith.constant 0 : i32
    return %arg0, %c0_i32, %c0_i32_0 : i32, i32, i32
  }
}

</mosaic_0001>

<llo_original>
// kernel: tpu_custom_call.1
$region0: #{tpu_custom_call.1}
  #allocation0 [shape = 'u32[]', space=smem, size = 0x4, offset = 0x4, fixed_abs, tag = 'smem constant byte address 0x4 - core index']
  #allocation1 [shape = 'u32[144,128]{1,0:T(1,128)}', space=vmem, size = 0x12000, scoped, tag = 'internal scratch']
  %s0 = inlined_call_operand.hbm [shape: f32[2,64,256], index: 0, kind: input, shape index: {}]
  %s1 = inlined_call_operand.vmem [shape: f32[64,4], index: 1, kind: input, shape index: {}]
  %s2 = inlined_call_operand.vmem [shape: f32[4,64], index: 2, kind: input, shape index: {}]
  %s3 = inlined_call_operand.hbm [shape: f32[2,64,256], index: 3, kind: output, shape index: {}]
  %s4 = sld [smem:[#allocation0]]
  $region49: #{tpu_custom_call.1} parent=0
    _
  %s6 = ssub.s32 1, %s4
  %s7 = scalar_select 0, %s6, %s4
  $region1: #{tpu_custom_call.1} parent=0
    #allocation2 [shape = 'u8[131072]{0}', space=vmem, size = 0x20000, scoped, tag = 'input window, operand 0']
    #allocation3 [shape = 's32[2]{0}', space=sflag, size = 0x8, scoped, tag = 'scoped memory for tpu_custom_call.1']
    #allocation4 [shape = 's32[2]{0}', space=sflag, size = 0x8, scoped, tag = 'scoped memory for tpu_custom_call.1']
    #allocation5 [shape = 'u8[131072]{0}', space=vmem, size = 0x20000, scoped, tag = 'output window, operand 0']
    %8 = vsyncpa [#allocation3], 0
    %s9 = scalar_lea.sflag [#allocation3], 1
    %10 = vsyncpa %s9, 0
    %11 = vsyncpa [#allocation4], 0
    %s12 = scalar_lea.sflag [#allocation4], 1
    %13 = vsyncpa %s12, 0
    loop: start=0, step=1, limit=4
    $region2: #{tpu_custom_call.1} parent=1 // loop_pre_header
      _
    $region3: #{tpu_custom_call.1} parent=1 // loop_header
      %s15 = sphi 0, %s19
      %p16 = scmp.ge.s32.totalorder %s15, 4
      %s25 = sphi 0, %s27
      %s28 = sphi 0, %s25
      %s29 = sphi 0, %s28
      %s45 = sphi 0, %s29
      %s49 = sphi 0, %s49
      %s51 = sphi 0, %s49
      %s52 = sphi 0, %s51
      %s66 = sphi 0, %s52
      %s70 = sphi 0, %s70
      %s72 = sphi 0, %s70
      %s73 = sphi 0, %s72
      %s87 = sphi 0, %s73
      %s93 = sphi 0, %s95
      %s96 = sphi 0, %s93
      %s97 = sphi 0, %s96
      %s113 = sphi 0, %s97
    $region4: #{tpu_custom_call.1} parent=1 // loop_header_branch
      %18 = sbr.rel (%p16) target = $region8
    $region5: #{tpu_custom_call.1} parent=1 // loop_body
      %s20 = ssub.s32 %s15, 1
      %s21 = ssub.s32 %s15, 2
      %s22 = sadd.s32 %s15, 1
      %s23 = ssub.s32 %s15, %s22
      %p24 = scmp.eq.s32.totalorder %s23, 0
      %s26 = sadd.s32 %s25, 1
      %s27 = scalar_select %p24, %s25, %s26
      %p30 = pneg %p24
      %p31 = scmp.eq.s32.totalorder %s15, 1
      %p32 = por %p30, %p31
      %p33 = scmp.ne.s32.totalorder %s25, %s28
      %p34 = scmp.eq.s32.totalorder %s15, 0
      %p35 = por %p33, %p34
      %p36 = scmp.ne.s32.totalorder %s25, %s28
      %p37 = scmp.eq.s32.totalorder %s20, 1
      %p38 = por %p36, %p37
      %p39 = scmp.ne.s32.totalorder %s28, %s29
      %p40 = scmp.eq.s32.totalorder %s20, 0
      %p41 = por %p39, %p40
      %p42 = scmp.ne.s32.totalorder %s28, %s29
      %p43 = scmp.eq.s32.totalorder %s21, 1
      %p44 = por %p42, %p43
      %p46 = scmp.ne.s32.totalorder %s29, %s45
      %p47 = scmp.eq.s32.totalorder %s21, 0
      %p48 = por %p46, %p47
      %s50 = sadd.s32 %s49, 1
      %p53 = scmp.eq.s32.totalorder %s15, 1
      %p54 = scmp.ne.s32.totalorder %s49, %s51
      %p55 = scmp.eq.s32.totalorder %s15, 0
      %p56 = por %p54, %p55
      %p57 = scmp.ne.s32.totalorder %s49, %s51
      %p58 = scmp.eq.s32.totalorder %s20, 1
      %p59 = por %p57, %p58
      %p60 = scmp.ne.s32.totalorder %s51, %s52
      %p61 = scmp.eq.s32.totalorder %s20, 0
      %p62 = por %p60, %p61
      %p63 = scmp.ne.s32.totalorder %s51, %s52
      %p64 = scmp.eq.s32.totalorder %s21, 1
      %p65 = por %p63, %p64
      %p67 = scmp.ne.s32.totalorder %s52, %s66
      %p68 = scmp.eq.s32.totalorder %s21, 0
      %p69 = por %p67, %p68
      %s71 = sadd.s32 %s70, 1
      %p74 = scmp.eq.s32.totalorder %s15, 1
      %p75 = scmp.ne.s32.totalorder %s70, %s72
      %p76 = scmp.eq.s32.totalorder %s15, 0
      %p77 = por %p75, %p76
      %p78 = scmp.ne.s32.totalorder %s70, %s72
      %p79 = scmp.eq.s32.totalorder %s20, 1
      %p80 = por %p78, %p79
      %p81 = scmp.ne.s32.totalorder %s72, %s73
      %p82 = scmp.eq.s32.totalorder %s20, 0
      %p83 = por %p81, %p82
      %p84 = scmp.ne.s32.totalorder %s72, %s73
      %p85 = scmp.eq.s32.totalorder %s21, 1
      %p86 = por %p84, %p85
      %p88 = scmp.ne.s32.totalorder %s73, %s87
      %p89 = scmp.eq.s32.totalorder %s21, 0
      %p90 = por %p88, %p89
      %s91 = ssub.s32 %s15, %s22
      %p92 = scmp.eq.s32.totalorder %s91, 0
      %s94 = sadd.s32 %s93, 1
      %s95 = scalar_select %p92, %s93, %s94
      %p98 = pneg %p92
      %p99 = scmp.eq.s32.totalorder %s15, 1
      %p100 = por %p98, %p99
      %p101 = scmp.ne.s32.totalorder %s93, %s96
      %p102 = scmp.eq.s32.totalorder %s15, 0
      %p103 = por %p101, %p102
      %p104 = scmp.ne.s32.totalorder %s93, %s96
      %p105 = scmp.eq.s32.totalorder %s20, 1
      %p106 = por %p104, %p105
      %p107 = scmp.ne.s32.totalorder %s96, %s97
      %p108 = scmp.eq.s32.totalorder %s20, 0
      %p109 = por %p107, %p108
      %p110 = scmp.ne.s32.totalorder %s96, %s97
      %p111 = scmp.eq.s32.totalorder %s21, 1
      %p112 = por %p110, %p111
      %p114 = scmp.ne.s32.totalorder %s97, %s113
      %p115 = scmp.eq.s32.totalorder %s21, 0
      %p116 = por %p114, %p115
      %p117 = scmp.le.s32.totalorder 1, %s15
      %p118 = scmp.lt.s32.totalorder %s15, 3
      %p119 = pnand %p117, %p118
      %p120 = pneg %p119
      // Predicated region
      $region9: #{tpu_custom_call.1} parent=5 // pred_check
        _
      $region10: #{tpu_custom_call.1} parent=5 // pred_check_branch
        %122 = sbr.rel (%p119) target = $region12
      $region11: #{tpu_custom_call.1} parent=5 // pred_region
        %s123 = ssub.s32 %s15, 1
        // Predicated region
        $region13: #{tpu_custom_call.1} parent=11 // pred_check
          %p124 = pneg %p62
        $region14: #{tpu_custom_call.1} parent=11 // pred_check_branch
          %126 = sbr.rel (%p124) target = $region16
        $region15: #{tpu_custom_call.1} parent=11 // pred_region
          _
        $region16: #{tpu_custom_call.1} parent=11 // pred_fallthru
          _
        // Predicated region
        $region17: #{tpu_custom_call.1} parent=11 // pred_check
          %p127 = pneg %p83
        $region18: #{tpu_custom_call.1} parent=11 // pred_check_branch
          %129 = sbr.rel (%p127) target = $region20
        $region19: #{tpu_custom_call.1} parent=11 // pred_region
          _
        $region20: #{tpu_custom_call.1} parent=11 // pred_fallthru
          _
      $region12: #{tpu_custom_call.1} parent=5 // pred_fallthru
        _
      %p130 = scmp.lt.s32.totalorder %s15, 2
      // Predicated region
      $region21: #{tpu_custom_call.1} parent=5 // pred_check
        %p131 = pneg %p130
      $region22: #{tpu_custom_call.1} parent=5 // pred_check_branch
        %133 = sbr.rel (%p131) target = $region24
      $region23: #{tpu_custom_call.1} parent=5 // pred_region
        // Predicated region
        $region25: #{tpu_custom_call.1} parent=23 // pred_check
          %p134 = pneg %p35
        $region26: #{tpu_custom_call.1} parent=23 // pred_check_branch
          %136 = sbr.rel (%p134) target = $region28
        $region27: #{tpu_custom_call.1} parent=23 // pred_region
          %s137 = sand.u32 %s25, 1
          %s138 = scalar_lea.sflag [#allocation3], %s137
          %s139 = sand.u32 %s25, 1
          %s140 = smul.addr %s139, 128
          %s141 = scalar_lea.vmem [#allocation2], %s140
          %s143 = ssub.s32 2048, 2048
          %144 = vsyncadd %s138, %s143
          %s145 = smul.addr %s15, 16
          %s146 = smul.addr %s145, 128
          %s147 = scalar_lea.hbm %s0, %s146
          %s148 = sshll.u32 %s141, 4
          %s149 = int_to_ptr.vmem [resolvable:$true] %s148
          %154 = dma.hbm_to_vmem [thread:$0]  %s147, 2048, %s149, %s138, 256, 256, 16
        $region28: #{tpu_custom_call.1} parent=23 // pred_fallthru
          _
      $region24: #{tpu_custom_call.1} parent=5 // pred_fallthru
        _
      %p155 = scmp.le.s32.totalorder 1, %s15
      %p156 = scmp.lt.s32.totalorder %s15, 3
      %p157 = pnand %p155, %p156
      %p158 = pneg %p157
      // Predicated region
      $region29: #{tpu_custom_call.1} parent=5 // pred_check
        _
      $region30: #{tpu_custom_call.1} parent=5 // pred_check_branch
        %160 = sbr.rel (%p157) target = $region32
      $region31: #{tpu_custom_call.1} parent=5 // pred_region
        %s161 = ssub.s32 %s15, 1
        %s162 = sand.u32 %s28, 1
        %s163 = scalar_lea.sflag [#allocation3], %s162
        %s164 = sand.u32 %s28, 1
        %s165 = smul.addr %s164, 128
        %s166 = scalar_lea.vmem [#allocation2], %s165
        // Predicated region
        $region33: #{tpu_custom_call.1} parent=31 // pred_check
          %p167 = pneg %p41
        $region34: #{tpu_custom_call.1} parent=31 // pred_check_branch
          %169 = sbr.rel (%p167) target = $region36
        $region35: #{tpu_custom_call.1} parent=31 // pred_region
          %170 = dma.done %s163, 2048
        $region36: #{tpu_custom_call.1} parent=31 // pred_fallthru
          _
        %s171 = sand.u32 %s28, 1
        %s172 = scalar_lea.sflag [#allocation3], %s171
        %s173 = sand.u32 %s28, 1
        %s174 = smul.addr %s173, 128
        %s175 = scalar_lea.vmem [#allocation2], %s174
        %p176 = pneg %p41
        %p177 = pneg %p38
        %p178 = pneg %p62
        %p179 = pneg %p59
        %p180 = pneg %p83
        %p181 = pneg %p80
        %p182 = pneg %p109
        %p183 = pneg %p106
        %s184 = sand.u32 %s96, 1
        %s185 = scalar_lea.sflag [#allocation4], %s184
        %s186 = sand.u32 %s96, 1
        %s187 = smul.addr %s186, 128
        %s188 = scalar_lea.vmem [#allocation5], %s187
        %v189 = vld [vmem:[%s166] sm:$0xff]
        %v190 = vld [vmem:[%s166 + $0x8] sm:$0xff]
        %v191 = vld [vmem:[%s166 + $0x10] sm:$0xff]
        %v192 = vld [vmem:[%s166 + $0x18] sm:$0xff]
        %v193 = vld [vmem:[%s166 + $0x20] sm:$0xff]
        %v194 = vld [vmem:[%s166 + $0x28] sm:$0xff]
        %v195 = vld [vmem:[%s166 + $0x30] sm:$0xff]
        %v196 = vld [vmem:[%s166 + $0x38] sm:$0xff]
        %v197 = vld [vmem:[%s166 + $0x40] sm:$0xff]
        %v198 = vld [vmem:[%s166 + $0x48] sm:$0xff]
        %v199 = vld [vmem:[%s166 + $0x50] sm:$0xff]
        %v200 = vld [vmem:[%s166 + $0x58] sm:$0xff]
        %v201 = vld [vmem:[%s166 + $0x60] sm:$0xff]
        %v202 = vld [vmem:[%s166 + $0x68] sm:$0xff]
        %v203 = vld [vmem:[%s166 + $0x70] sm:$0xff]
        %v204 = vld [vmem:[%s166 + $0x78] sm:$0xff]
        %v205 = vadd.f32 %v189, %v190
        %206 = vadd.xlane.f32.xlu0 %v205
        %v207 = vpop.xlane.xlu0 %206
        %v208 = vadd.f32 %v191, %v192
        %209 = vadd.xlane.f32.xlu0 %v208
        %v210 = vpop.xlane.xlu0 %209
        %v211 = vadd.f32 %v193, %v194
        %212 = vadd.xlane.f32.xlu0 %v211
        %v213 = vpop.xlane.xlu0 %212
        %v214 = vadd.f32 %v195, %v196
        %215 = vadd.xlane.f32.xlu0 %v214
        %v216 = vpop.xlane.xlu0 %215
        %v217 = vadd.f32 %v197, %v198
        %218 = vadd.xlane.f32.xlu0 %v217
        %v219 = vpop.xlane.xlu0 %218
        %v220 = vadd.f32 %v199, %v200
        %221 = vadd.xlane.f32.xlu0 %v220
        %v222 = vpop.xlane.xlu0 %221
        %v223 = vadd.f32 %v201, %v202
        %224 = vadd.xlane.f32.xlu0 %v223
        %v225 = vpop.xlane.xlu0 %224
        %v226 = vadd.f32 %v203, %v204
        %227 = vadd.xlane.f32.xlu0 %v226
        %v228 = vpop.xlane.xlu0 %227
        %v229 = vmax.f32 %v189, %v190
        %230 = vmax.xlane.f32.xlu0 %v229
        %v231 = vpop.xlane.xlu0 %230
        %v232 = vmax.f32 %v191, %v192
        %233 = vmax.xlane.f32.xlu0 %v232
        %v234 = vpop.xlane.xlu0 %233
        %v235 = vmax.f32 %v193, %v194
        %236 = vmax.xlane.f32.xlu0 %v235
        %v237 = vpop.xlane.xlu0 %236
        %v238 = vmax.f32 %v195, %v196
        %239 = vmax.xlane.f32.xlu0 %v238
        %v240 = vpop.xlane.xlu0 %239
        %v241 = vmax.f32 %v197, %v198
        %242 = vmax.xlane.f32.xlu0 %v241
        %v243 = vpop.xlane.xlu0 %242
        %v244 = vmax.f32 %v199, %v200
        %245 = vmax.xlane.f32.xlu0 %v244
        %v246 = vpop.xlane.xlu0 %245
        %v247 = vmax.f32 %v201, %v202
        %248 = vmax.xlane.f32.xlu0 %v247
        %v249 = vpop.xlane.xlu0 %248
        %v250 = vmax.f32 %v203, %v204
        %251 = vmax.xlane.f32.xlu0 %v250
        %v252 = vpop.xlane.xlu0 %251
        %v253 = vmul.f32 %v207, 0.00390625
        %v254 = vmul.f32 %v210, 0.00390625
        %v255 = vmul.f32 %v213, 0.00390625
        %v256 = vmul.f32 %v216, 0.00390625
        %v257 = vmul.f32 %v219, 0.00390625
        %v258 = vmul.f32 %v222, 0.00390625
        %v259 = vmul.f32 %v225, 0.00390625
        %v260 = vmul.f32 %v228, 0.00390625
        %v261 = vadd.f32 %v253, %v231
        %v262 = vadd.f32 %v254, %v234
        %v263 = vadd.f32 %v255, %v237
        %v264 = vadd.f32 %v256, %v240
        %v265 = vadd.f32 %v257, %v243
        %v266 = vadd.f32 %v258, %v246
        %v267 = vadd.f32 %v259, %v249
        %v268 = vadd.f32 %v260, %v252
        %v269 = vld [vmem:[%s1] sm:$0xff]
        %v270 = vld [vmem:[%s1 + $0x8] sm:$0xff]
        %v271 = vld [vmem:[%s1 + $0x10] sm:$0xff]
        %v272 = vld [vmem:[%s1 + $0x18] sm:$0xff]
        %v273 = vld [vmem:[%s1 + $0x20] sm:$0xff]
        %v274 = vld [vmem:[%s1 + $0x28] sm:$0xff]
        %v275 = vld [vmem:[%s1 + $0x30] sm:$0xff]
        %v276 = vld [vmem:[%s1 + $0x38] sm:$0xff]
        %v285 = vlaneseq
        %v286 = vand.u32 %v285, 127
        %v287 = vlaneseq
        %v288 = vshrl.u32 %v287, 7
        %v289 = vsub.s32 %v286, %v288
        %v290 = vrot.slane %v261, %v289
        %v291 = vadd.s32 %v286, 4294967288
        %v292 = vlaneseq
        %v293 = vshrl.u32 %v292, 7
        %v294 = vsub.s32 %v291, %v293
        %v295 = vrot.slane %v262, %v294
        %vm296 = vcmask 130112
        %v297 = vsel %vm296, %v295, %v290
        %v298 = vadd.s32 %v286, 4294967280
        %v299 = vlaneseq
        %v300 = vshrl.u32 %v299, 7
        %v301 = vsub.s32 %v298, %v300
        %v302 = vrot.slane %v263, %v301
        %vm303 = vcmask 195712
        %v304 = vsel %vm303, %v302, %v297
        %v305 = vadd.s32 %v286, 4294967272
        %v306 = vlaneseq
        %v307 = vshrl.u32 %v306, 7
        %v308 = vsub.s32 %v305, %v307
        %v309 = vrot.slane %v264, %v308
        %vm310 = vcmask 261312
        %v311 = vsel %vm310, %v309, %v304
        %v312 = vadd.s32 %v286, 4294967264
        %v313 = vlaneseq
        %v314 = vshrl.u32 %v313, 7
        %v315 = vsub.s32 %v312, %v314
        %v316 = vrot.slane %v265, %v315
        %vm317 = vcmask 326912
        %v318 = vsel %vm317, %v316, %v311
        %v319 = vadd.s32 %v286, 4294967256
        %v320 = vlaneseq
        %v321 = vshrl.u32 %v320, 7
        %v322 = vsub.s32 %v319, %v321
        %v323 = vrot.slane %v266, %v322
        %vm324 = vcmask 392512
        %v325 = vsel %vm324, %v323, %v318
        %v326 = vadd.s32 %v286, 4294967248
        %v327 = vlaneseq
        %v328 = vshrl.u32 %v327, 7
        %v329 = vsub.s32 %v326, %v328
        %v330 = vrot.slane %v267, %v329
        %vm331 = vcmask 458112
        %v332 = vsel %vm331, %v330, %v325
        %v333 = vadd.s32 %v286, 4294967240
        %v334 = vlaneseq
        %v335 = vshrl.u32 %v334, 7
        %v336 = vsub.s32 %v333, %v335
        %v337 = vrot.slane %v268, %v336
        %vm338 = vcmask 523712
        %v339 = vsel %vm338, %v337, %v332
        %vm340 = vcmask 523264
        %v341 = vsel %vm340, %v339, 0
        %343 = vmatprep.subr.mxu0 0.0
        %344 = vmatpush1.msra.mxu0 %v269
        %345 = vmatprep.subr.mxu0 0.0
        %346 = vmatpush1.msra.mxu0 %v270
        %347 = vmatprep.subr.mxu0 0.0
        %348 = vmatpush1.msra.mxu0 %v271
        %349 = vmatprep.subr.mxu0 0.0
        %350 = vmatpush1.msra.mxu0 %v272
        %351 = vmatprep.subr.mxu0 0.0
        %352 = vmatpush1.msra.mxu0 %v273
        %353 = vmatprep.subr.mxu0 0.0
        %354 = vmatpush1.msra.mxu0 %v274
        %355 = vmatprep.subr.mxu0 0.0
        %356 = vmatpush1.msra.mxu0 %v275
        %357 = vmatprep.subr.mxu0 0.0
        %358 = vmatpush1.msra.mxu0 %v276
        %359 = vmatprep.subr.mxu0 0.0
        %360 = vmatpush1.msra.mxu0 0.0
        %361 = vmatprep.subr.mxu0 0.0
        %362 = vmatpush1.msra.mxu0 0.0
        %363 = vmatprep.subr.mxu0 0.0
        %364 = vmatpush1.msra.mxu0 0.0
        %365 = vmatprep.subr.mxu0 0.0
        %366 = vmatpush1.msra.mxu0 0.0
        %367 = vmatprep.subr.mxu0 0.0
        %368 = vmatpush1.msra.mxu0 0.0
        %369 = vmatprep.subr.mxu0 0.0
        %370 = vmatpush1.msra.mxu0 0.0
        %371 = vmatprep.subr.mxu0 0.0
        %372 = vmatpush1.msra.mxu0 0.0
        %373 = vmatprep.subr.mxu0 0.0
        %374 = vmatpush1.msra.mxu0 0.0
        %375 = vmatprep.subr.mxu0 0.0
        %376 = vmatpush1.msra.mxu0 0.0
        %377 = vmatprep.subr.mxu0 0.0
        %378 = vmatpush1.msra.mxu0 0.0
        %379 = vmatprep.subr.mxu0 0.0
        %380 = vmatpush1.msra.mxu0 0.0
        %381 = vmatprep.subr.mxu0 0.0
        %382 = vmatpush1.msra.mxu0 0.0
        %383 = vmatprep.subr.mxu0 0.0
        %384 = vmatpush1.msra.mxu0 0.0
        %385 = vmatprep.subr.mxu0 0.0
        %386 = vmatpush1.msra.mxu0 0.0
        %387 = vmatprep.subr.mxu0 0.0
        %388 = vmatpush1.msra.mxu0 0.0
        %389 = vmatprep.subr.mxu0 0.0
        %390 = vmatpush1.msra.mxu0 0.0
        %391 = vmatprep.subr.mxu0 0.0
        %392 = vmatpush1.msra.mxu0 0.0
        %393 = vmatprep.subr.mxu0 0.0
        %394 = vmatpush1.msra.mxu0 0.0
        %395 = vmatprep.subr.mxu0 0.0
        %396 = vmatpush1.msra.mxu0 0.0
        %397 = vmatprep.subr.mxu0 0.0
        %398 = vmatpush1.msra.mxu0 0.0
        %399 = vmatprep.subr.mxu0 0.0
        %400 = vmatpush1.msra.mxu0 0.0
        %401 = vmatprep.subr.mxu0 0.0
        %402 = vmatpush1.msra.mxu0 0.0
        %403 = vmatprep.subr.mxu0 0.0
        %404 = vmatpush1.msra.mxu0 0.0
        %405 = vmatprep.subr.mxu0 0.0
        %406 = vmatpush1.msra.mxu0 0.0
        %407 = vmatprep.mubr.f32.mxu0 0.0
        %408 = vmatmul.mubr.f32.gmra.mrb[0].mxu0 %v341
        %v409 = vpop.f32.mrb[0].mxu0
        %v410 = vadd.f32 0.0, %v409
        %v411 = vpop.f32.mrb[0].mxu0
        %412 = vdwg.mxu0
        %v413 = vmax.f32 %v410, 0.0
        %v414 = vld [vmem:[%s2] sm:$0xf]
        %vm415 = vcmask 31744
        %v417 = vsel %vm415, %v413, 0
        %vm419 = vcmask 1043456
        %v421 = vsel %vm419, %v414, 0
        %423 = vmatprep.subr.mxu0 0.0
        %424 = vmatpush1.msra.mxu0 %v421
        %425 = vmatprep.subr.mxu0 0.0
        %426 = vmatpush1.msra.mxu0 0.0
        %427 = vmatprep.subr.mxu0 0.0
        %428 = vmatpush1.msra.mxu0 0.0
        %429 = vmatprep.subr.mxu0 0.0
        %430 = vmatpush1.msra.mxu0 0.0
        %431 = vmatprep.subr.mxu0 0.0
        %432 = vmatpush1.msra.mxu0 0.0
        %433 = vmatprep.subr.mxu0 0.0
        %434 = vmatpush1.msra.mxu0 0.0
        %435 = vmatprep.subr.mxu0 0.0
        %436 = vmatpush1.msra.mxu0 0.0
        %437 = vmatprep.subr.mxu0 0.0
        %438 = vmatpush1.msra.mxu0 0.0
        %439 = vmatprep.subr.mxu0 0.0
        %440 = vmatpush1.msra.mxu0 0.0
        %441 = vmatprep.subr.mxu0 0.0
        %442 = vmatpush1.msra.mxu0 0.0
        %443 = vmatprep.subr.mxu0 0.0
        %444 = vmatpush1.msra.mxu0 0.0
        %445 = vmatprep.subr.mxu0 0.0
        %446 = vmatpush1.msra.mxu0 0.0
        %447 = vmatprep.subr.mxu0 0.0
        %448 = vmatpush1.msra.mxu0 0.0
        %449 = vmatprep.subr.mxu0 0.0
        %450 = vmatpush1.msra.mxu0 0.0
        %451 = vmatprep.subr.mxu0 0.0
        %452 = vmatpush1.msra.mxu0 0.0
        %453 = vmatprep.subr.mxu0 0.0
        %454 = vmatpush1.msra.mxu0 0.0
        %455 = vmatprep.subr.mxu0 0.0
        %456 = vmatpush1.msra.mxu0 0.0
        %457 = vmatprep.subr.mxu0 0.0
        %458 = vmatpush1.msra.mxu0 0.0
        %459 = vmatprep.subr.mxu0 0.0
        %460 = vmatpush1.msra.mxu0 0.0
        %461 = vmatprep.subr.mxu0 0.0
        %462 = vmatpush1.msra.mxu0 0.0
        %463 = vmatprep.subr.mxu0 0.0
        %464 = vmatpush1.msra.mxu0 0.0
        %465 = vmatprep.subr.mxu0 0.0
        %466 = vmatpush1.msra.mxu0 0.0
        %467 = vmatprep.subr.mxu0 0.0
        %468 = vmatpush1.msra.mxu0 0.0
        %469 = vmatprep.subr.mxu0 0.0
        %470 = vmatpush1.msra.mxu0 0.0
        %471 = vmatprep.subr.mxu0 0.0
        %472 = vmatpush1.msra.mxu0 0.0
        %473 = vmatprep.subr.mxu0 0.0
        %474 = vmatpush1.msra.mxu0 0.0
        %475 = vmatprep.subr.mxu0 0.0
        %476 = vmatpush1.msra.mxu0 0.0
        %477 = vmatprep.subr.mxu0 0.0
        %478 = vmatpush1.msra.mxu0 0.0
        %479 = vmatprep.subr.mxu0 0.0
        %480 = vmatpush1.msra.mxu0 0.0
        %481 = vmatprep.subr.mxu0 0.0
        %482 = vmatpush1.msra.mxu0 0.0
        %483 = vmatprep.subr.mxu0 0.0
        %484 = vmatpush1.msra.mxu0 0.0
        %485 = vmatprep.subr.mxu0 0.0
        %486 = vmatpush1.msra.mxu0 0.0
        %487 = vmatprep.mubr.f32.mxu0 0.0
        %488 = vmatmul.mubr.f32.gmra.mrb[0].mxu0 %v417
        %v489 = vpop.f32.mrb[0].mxu0
        %v490 = vadd.f32 0.0, %v489
        %v491 = vpop.f32.mrb[0].mxu0
        %492 = vdwg.mxu0
        %v493 = vxor.u32 %v490, 2147483648
        %v494 = vmul.f32 %v493, 1.442695
        %v495 = vpow.pop %v494
        %v496 = vadd.f32 %v495, 1.0
        %v497 = vrcp.pop %v496
        %v498 = vmul.f32 1.0, %v497
        %v499 = vlaneseq
        %v500 = vshrl.u32 %v499, 7
        %v501 = vsub.s32 0, %v500
        %v502 = vrot.slane %v498, %v501
        %504 = vbcast.lane.b32.xlu0 %v502, 256
        %v505 = vpop.permute.xlu0 %504
        %s507 = sor.u32 256, 8
        %508 = vbcast.lane.b32.xlu0 %v502, %s507
        %v509 = vpop.permute.xlu0 %508
        %s511 = sor.u32 256, 16
        %512 = vbcast.lane.b32.xlu0 %v502, %s511
        %v513 = vpop.permute.xlu0 %512
        %s515 = sor.u32 256, 24
        %516 = vbcast.lane.b32.xlu0 %v502, %s515
        %v517 = vpop.permute.xlu0 %516
        %s519 = sor.u32 256, 32
        %520 = vbcast.lane.b32.xlu0 %v502, %s519
        %v521 = vpop.permute.xlu0 %520
        %s523 = sor.u32 256, 40
        %524 = vbcast.lane.b32.xlu0 %v502, %s523
        %v525 = vpop.permute.xlu0 %524
        %s527 = sor.u32 256, 48
        %528 = vbcast.lane.b32.xlu0 %v502, %s527
        %v529 = vpop.permute.xlu0 %528
        %s531 = sor.u32 256, 56
        %532 = vbcast.lane.b32.xlu0 %v502, %s531
        %v533 = vpop.permute.xlu0 %532
        %v534 = vmul.f32 %v189, %v505
        %v535 = vmul.f32 %v190, %v505
        %v536 = vmul.f32 %v191, %v509
        %v537 = vmul.f32 %v192, %v509
        %v538 = vmul.f32 %v193, %v513
        %v539 = vmul.f32 %v194, %v513
        %v540 = vmul.f32 %v195, %v517
        %v541 = vmul.f32 %v196, %v517
        %v542 = vmul.f32 %v197, %v521
        %v543 = vmul.f32 %v198, %v521
        %v544 = vmul.f32 %v199, %v525
        %v545 = vmul.f32 %v200, %v525
        %v546 = vmul.f32 %v201, %v529
        %v547 = vmul.f32 %v202, %v529
        %v548 = vmul.f32 %v203, %v533
        %v549 = vmul.f32 %v204, %v533
        %550 = vst [vmem:[%s188] sm:$0xff] %v534
        %551 = vst [vmem:[%s188 + $0x8] sm:$0xff] %v535
        %552 = vst [vmem:[%s188 + $0x10] sm:$0xff] %v536
        %553 = vst [vmem:[%s188 + $0x18] sm:$0xff] %v537
        %554 = vst [vmem:[%s188 + $0x20] sm:$0xff] %v538
        %555 = vst [vmem:[%s188 + $0x28] sm:$0xff] %v539
        %556 = vst [vmem:[%s188 + $0x30] sm:$0xff] %v540
        %557 = vst [vmem:[%s188 + $0x38] sm:$0xff] %v541
        %558 = vst [vmem:[%s188 + $0x40] sm:$0xff] %v542
        %559 = vst [vmem:[%s188 + $0x48] sm:$0xff] %v543
        %560 = vst [vmem:[%s188 + $0x50] sm:$0xff] %v544
        %561 = vst [vmem:[%s188 + $0x58] sm:$0xff] %v545
        %562 = vst [vmem:[%s188 + $0x60] sm:$0xff] %v546
        %563 = vst [vmem:[%s188 + $0x68] sm:$0xff] %v547
        %564 = vst [vmem:[%s188 + $0x70] sm:$0xff] %v548
        %565 = vst [vmem:[%s188 + $0x78] sm:$0xff] %v549
        %s566 = sand.u32 %s96, 1
        %s567 = scalar_lea.sflag [#allocation4], %s566
        %s568 = sand.u32 %s96, 1
        %s569 = smul.addr %s568, 128
        %s570 = scalar_lea.vmem [#allocation5], %s569
        // Predicated region
        $region37: #{tpu_custom_call.1} parent=31 // pred_check
          %p571 = pneg %p106
        $region38: #{tpu_custom_call.1} parent=31 // pred_check_branch
          %573 = sbr.rel (%p571) target = $region40
        $region39: #{tpu_custom_call.1} parent=31 // pred_region
          %s575 = ssub.s32 2048, 2048
          %576 = vsyncadd %s567, %s575
          %s577 = smul.addr %s20, 16
          %s578 = smul.addr %s577, 128
          %s579 = scalar_lea.hbm %s3, %s578
          %s580 = sshll.u32 %s570, 4
          %s581 = int_to_ptr.vmem [resolvable:$true] %s580
          %586 = dma.vmem_to_hbm [thread:$0]  %s581, 2048, %s579, %s567, 256, 256, 16
        $region40: #{tpu_custom_call.1} parent=31 // pred_fallthru
          _
      $region32: #{tpu_custom_call.1} parent=5 // pred_fallthru
        _
      %p587 = scmp.le.s32.totalorder 2, %s15
      // Predicated region
      $region41: #{tpu_custom_call.1} parent=5 // pred_check
        %p588 = pneg %p587
      $region42: #{tpu_custom_call.1} parent=5 // pred_check_branch
        %590 = sbr.rel (%p588) target = $region44
      $region43: #{tpu_custom_call.1} parent=5 // pred_region
        %s591 = ssub.s32 %s15, 2
        // Predicated region
        $region45: #{tpu_custom_call.1} parent=43 // pred_check
          %p592 = pneg %p112
        $region46: #{tpu_custom_call.1} parent=43 // pred_check_branch
          %594 = sbr.rel (%p592) target = $region48
        $region47: #{tpu_custom_call.1} parent=43 // pred_region
          %s595 = sand.u32 %s97, 1
          %s596 = scalar_lea.sflag [#allocation4], %s595
          %s597 = sand.u32 %s97, 1
          %s598 = smul.addr %s597, 128
          %s599 = scalar_lea.vmem [#allocation5], %s598
          %600 = dma.done %s596, 2048
        $region48: #{tpu_custom_call.1} parent=43 // pred_fallthru
          _
      $region44: #{tpu_custom_call.1} parent=5 // pred_fallthru
        _
    $region6: #{tpu_custom_call.1} parent=1 // loop_footer
      %s19 = sadd.s32 1, %s15
    $region7: #{tpu_custom_call.1} parent=1 // loop_footer_branch
      %14 = sbr.rel target = $region3
    $region8: #{tpu_custom_call.1} parent=1 // loop_exit
      _
    %601 = vsyncpa [#allocation3], 1
    %s602 = scalar_lea.sflag [#allocation3], 1
    %603 = vsyncpa %s602, 1
    %604 = vsyncpa [#allocation4], 1
    %s605 = scalar_lea.sflag [#allocation4], 1
    %606 = vsyncpa %s605, 1

</llo_original>
